<compile_context>
chip_gen: v7x
topology: tpu7x:2x2x1
jax: 0.10.0
libtpu: 0.0.40
codegen_flags: <defaults>
</compile_context>

<pallas_src>
import functools

import jax
import jax.numpy as jnp
import numpy as np
from jax.experimental import pallas as pl
from jax.experimental.pallas import tpu as pltpu


def _round_up(x, m):
    return ((x + m - 1) // m) * m


def fused_model_kernel(wave_ref, maskp_ref,
                       w_fused_ref, b_fused_ref,
                       w_cls_ref, b_cls_ref,
                       out_ref, *, n_frames, frame_size):
    """One grid step processes Bb batch elements end-to-end.

    wave_ref   : (Bb, L)   raw waveform, f32 (L = n_frames * frame_size)
    maskp_ref  : (Bb, T)   mask pre-scaled by 1/(sum(mask)+eps), f32
    w_fused_ref: (W, Hp)   fused encoder@backbone weight (bf16 or f32)
    b_fused_ref: (1, Hp)   fused bias, f32
    w_cls_ref  : (Hp, Cp)  classifier weight, f32
    b_cls_ref  : (1, Cp)   classifier bias, f32
    out_ref    : (Bb, Cp)  logits, f32 (lane-dense, Cp = 128-padded)
    """
    Bb = out_ref.shape[0]
    Hp = w_fused_ref.shape[1]

    w_fused = w_fused_ref[...]            # hoisted: loaded once per grid step
    b_fused = b_fused_ref[...]

    # Masked mean-pool accumulated across the T frames of each clip; the mask
    # already carries the 1/denominator, so no in-kernel reduction or divide.
    # T is small and static, so a Python loop (fully unrolled) is fine here.
    # TODO(synk): for configs with large T, switch to a fori_loop / reshape+
    # sublane-reduce form to avoid unrolling hundreds of matmuls.
    pooled = jnp.zeros((Bb, Hp), jnp.float32)
    for t in range(n_frames):
        frame = wave_ref[:, t * frame_size:(t + 1) * frame_size]      # (Bb, W) f32
        emb = jnp.dot(frame.astype(w_fused.dtype), w_fused,
                      preferred_element_type=jnp.float32) + b_fused   # (Bb, Hp) f32
        emb = jnp.maximum(emb, 0.0)
        pooled = pooled + maskp_ref[:, t:t + 1] * emb

    # Classifier epilogue (f32, tiny): lane-dense (Bb, 128) logits store.
    logits = jnp.dot(pooled, w_cls_ref[...],
                     preferred_element_type=jnp.float32) + b_cls_ref[...]
    out_ref[...] = logits.astype(out_ref.dtype)


def _vmem_estimate(bb, *, L, T, W, Hp, Cp, wbytes):
    """Honest per-step VMEM estimate (double-buffered I/O + temps + weights)."""
    lane = 128
    wave_b = 2 * bb * _round_up(L, lane) * 4
    mask_b = 2 * bb * _round_up(T, lane) * 4
    out_b = 2 * bb * Cp * 4
    temps = bb * _round_up(W, lane) * wbytes + 2 * bb * Hp * 4   # frame cast + emb + acc
    wgts = 2 * (W * Hp * wbytes + Hp * 4 + Hp * Cp * 4 + Cp * 4)  # still double-buffered
    return wave_b + mask_b + out_b + temps + wgts


def _choose_batch_block(B, T, *, L, W, Hp, Cp, wbytes):
    """How many batch elements (Bb) to fold into each grid step."""
    # Target ~2048 frame rows per step to escape per-step pipeline overhead.
    target_rows = 2048
    Bb = _round_up(min(B, max(1, target_rows // max(T, 1))), 8)

    # Budget fits v5e's 16 MiB default scoped VMEM (and leaves v7x headroom).
    budget = 12 * 1024 * 1024
    while Bb > 8 and _vmem_estimate(Bb, L=L, T=T, W=W, Hp=Hp, Cp=Cp,
                                    wbytes=wbytes) > budget:
        Bb = _round_up(Bb // 2, 8)

    # v7x megacore: prefer an even grid of length >= 2 when each block still
    # carries >= 128 rows of MXU work (neutral on single-TC v5e/v6e).
    G = -(-B // Bb)
    if G % 2 == 1 and B * T >= 256:
        Bb_even = _round_up(-(-B // (G + 1)), 8)
        if Bb_even * T >= 128:
            Bb = Bb_even
    return Bb


def model_forward(waveform, mask, params, *, frame_size, use_bf16=True):
    """waveform: [B, L] float32, mask: [B, T] float (T = L // frame_size)."""
    B, L = waveform.shape
    W = frame_size
    T = L // W
    w_enc, b_enc, w_bb, b_bb, w_cls, b_cls = params
    D = w_enc.shape[1]
    H = w_bb.shape[1]
    C = w_cls.shape[1]

    Hp = _round_up(H, 128)
    Cp = _round_up(C, 128)
    compute_dtype = jnp.bfloat16 if use_bf16 else jnp.float32
    wbytes = jnp.dtype(compute_dtype).itemsize

    # --- algebraic fusion of encoder + backbone (no nonlinearity in between) ---
    hi = jax.lax.Precision.HIGHEST
    w_fused = jnp.dot(w_enc, w_bb, precision=hi)                            # (W, H)
    b_fused = jnp.dot(b_enc.reshape(1, D), w_bb, precision=hi) + b_bb.reshape(1, H)
    w_fused_p = jnp.pad(w_fused, ((0, 0), (0, Hp - H))).astype(compute_dtype)
    b_fused_p = jnp.pad(b_fused, ((0, 0), (0, Hp - H))).astype(jnp.float32)
    # Classifier stays f32 (tiny); padded to lane width for dense stores.
    w_cls_p = jnp.pad(w_cls, ((0, Hp - H), (0, Cp - C))).astype(jnp.float32)
    b_cls_p = jnp.pad(b_cls.reshape(1, C), ((0, 0), (0, Cp - C))).astype(jnp.float32)

    Bb = _choose_batch_block(B, T, L=L, W=W, Hp=Hp, Cp=Cp, wbytes=wbytes)
    G = -(-B // Bb)
    B_pad = G * Bb

    # f32 waveform goes straight to the kernel; padded rows have zero mask so
    # they pool to zero and are sliced away afterwards.
    wave_p = jnp.pad(waveform, ((0, B_pad - B), (0, 0)))
    mask_f = jnp.pad(mask.astype(jnp.float32), ((0, B_pad - B), (0, 0)))
    inv_denom = 1.0 / (jnp.sum(mask_f, axis=1, keepdims=True) + 1e-6)
    maskp = mask_f * inv_denom                                              # (B_pad, T)

    kernel = functools.partial(fused_model_kernel, n_frames=T, frame_size=W)
    logits_p = pl.pallas_call(
        kernel,
        out_shape=jax.ShapeDtypeStruct((B_pad, Cp), jnp.float32),
        grid_spec=pltpu.PrefetchScalarGridSpec(
            num_scalar_prefetch=0,
            grid=(G,),
            in_specs=[
                pl.BlockSpec((Bb, L), lambda g: (g, 0)),     # waveform (f32)
                pl.BlockSpec((Bb, T), lambda g: (g, 0)),     # pre-scaled mask
                # Constant-index weight blocks: Pallas DMAs them only once
                # (the block index never changes across the grid).
                pl.BlockSpec((W, Hp), lambda g: (0, 0)),     # fused enc@bb weight
                pl.BlockSpec((1, Hp), lambda g: (0, 0)),     # fused bias
                pl.BlockSpec((Hp, Cp), lambda g: (0, 0)),    # classifier weight
                pl.BlockSpec((1, Cp), lambda g: (0, 0)),     # classifier bias
            ],
            out_specs=pl.BlockSpec((Bb, Cp), lambda g: (g, 0)),
        ),
        compiler_params=pltpu.CompilerParams(
            dimension_semantics=("parallel",),
            vmem_limit_bytes=32 * 1024 * 1024,
        ),
    )(wave_p, maskp, w_fused_p, b_fused_p, w_cls_p, b_cls_p)

    return logits_p[:B, :C]


def reference_forward(waveform, mask, params, *, frame_size):
    """Pure-JAX f32 reference (two-stage, un-fused) for correctness check."""
    B, L = waveform.shape
    W = frame_size
    T = L // W
    frames = waveform.reshape(B, T, W)
    mask3 = mask.reshape(B, T, 1).astype(jnp.float32)
    w_enc, b_enc, w_bb, b_bb, w_cls, b_cls = params
    feat = jnp.einsum('btw,wd->btd', frames, w_enc) + b_enc
    emb = jnp.maximum(jnp.einsum('btd,dh->bth', feat, w_bb) + b_bb, 0.0) * mask3
    pooled = jnp.sum(emb, axis=1) / (jnp.sum(mask3, axis=1) + 1e-6)
    return jnp.einsum('bh,hc->bc', pooled, w_cls) + b_cls


if __name__ == "__main__":
    # small shapes: batch=2, frame_size=64, frames=8, feat_dim=32, hidden=32, classes=4
    B, W, T, D, H, C = 2, 64, 8, 32, 32, 4
    L = T * W

    key = jax.random.PRNGKey(0)
    k_wave, k_we, k_wb, k_wc = jax.random.split(key, 4)

    waveform = jax.random.normal(k_wave, (B, L), dtype=jnp.float32)
    # mask: first batch element fully valid, second has last 3 frames masked out
    mask = jnp.stack([
        jnp.ones((T,), jnp.float32),
        jnp.concatenate([jnp.ones((T - 3,), jnp.float32),
                         jnp.zeros((3,), jnp.float32)]),
    ], axis=0)

    # deterministic parameter init (synthetic; no checkpoint load)
    # TODO(synk): pretrained checkpoint loading / freeze-unfreeze logic of the
    # PyTorch wrapper is training-time bookkeeping, not part of the forward pass.
    w_enc = jax.random.normal(k_we, (W, D), dtype=jnp.float32) * 0.05
    b_enc = jnp.zeros((1, D), jnp.float32)
    w_bb = jax.random.normal(k_wb, (D, H), dtype=jnp.float32) * 0.1
    b_bb = jnp.full((1, H), 0.01, jnp.float32)
    w_cls = jax.random.normal(k_wc, (H, C), dtype=jnp.float32) * 0.1
    b_cls = jnp.zeros((1, C), jnp.float32)
    params = (w_enc, b_enc, w_bb, b_bb, w_cls, b_cls)

    ref = reference_forward(waveform, mask, params, frame_size=W)

    # f32 path. Tolerance covers the (intended) reassociation from fusing the
    # two linear layers plus TPU default-precision matmul differences.
    out_f32 = model_forward(waveform, mask, params, frame_size=W, use_bf16=False)
    out_f32 = jax.block_until_ready(out_f32)
    np.testing.assert_allclose(np.asarray(out_f32), np.asarray(ref),
                               rtol=2e-3, atol=2e-3)

    # bf16 matmul-input path (v6e/v7x throughput mode): f32 accumulation.
    out_bf16 = model_forward(waveform, mask, params, frame_size=W, use_bf16=True)
    out_bf16 = jax.block_until_ready(out_bf16)
    np.testing.assert_allclose(np.asarray(out_bf16), np.asarray(ref),
                               rtol=2e-2, atol=2e-2)

    print("KERNEL_OK")
</pallas_src>

<mosaic_0001>
module attributes {stable_mosaic.version = 11 : i64} {
  func.func @fused_model_kernel(%arg0: i32, %arg1: memref<8x512xf32, #tpu.memory_space<vmem>>, %arg2: memref<8x8xf32, #tpu.memory_space<vmem>>, %arg3: memref<64x128xf32, #tpu.memory_space<vmem>>, %arg4: memref<1x128xf32, #tpu.memory_space<vmem>>, %arg5: memref<128x128xf32, #tpu.memory_space<vmem>>, %arg6: memref<1x128xf32, #tpu.memory_space<vmem>>, %arg7: memref<8x128xf32, #tpu.memory_space<vmem>>) attributes {dimension_semantics = [#tpu.dimension_semantics<parallel>], iteration_bounds = array<i64: 1>, scalar_prefetch = 0 : i64, scratch_operands = 0 : i64, tpu.core_type = #tpu.core_type<tc>, window_params = [{transform_indices = @transform_0, window_bounds = array<i64: 8, 512>}, {transform_indices = @transform_1, window_bounds = array<i64: 8, 8>}, {pipeline_mode = #tpu.pipeline_mode<synchronous>, transform_indices = @transform_2, window_bounds = array<i64: 64, 128>}, {pipeline_mode = #tpu.pipeline_mode<synchronous>, transform_indices = @transform_3, window_bounds = array<i64: 1, 128>}, {pipeline_mode = #tpu.pipeline_mode<synchronous>, transform_indices = @transform_4, window_bounds = array<i64: 128, 128>}, {pipeline_mode = #tpu.pipeline_mode<synchronous>, transform_indices = @transform_5, window_bounds = array<i64: 1, 128>}, {transform_indices = @transform_6, window_bounds = array<i64: 8, 128>}]} {
    %c0 = arith.constant 0 : index
    %c0_0 = arith.constant 0 : index
    %0 = vector.load %arg3[%c0, %c0_0] : memref<64x128xf32, #tpu.memory_space<vmem>>, vector<64x128xf32>
    %c0_1 = arith.constant 0 : index
    %c0_2 = arith.constant 0 : index
    %1 = vector.load %arg4[%c0_1, %c0_2] : memref<1x128xf32, #tpu.memory_space<vmem>>, vector<1x128xf32>
    %cst = arith.constant 0.000000e+00 : f32
    %2 = vector.broadcast %cst : f32 to vector<8x128xf32>
    %c0_3 = arith.constant 0 : index
    %c0_4 = arith.constant 0 : index
    %3 = vector.load %arg1[%c0_3, %c0_4] : memref<8x512xf32, #tpu.memory_space<vmem>>, vector<8x64xf32>
    %cst_5 = arith.constant dense<0.000000e+00> : vector<8x128xf32>
    %4 = tpu.matmul %3, %0, %cst_5 {dimension_numbers = #tpu.dot_dimension_numbers<[1], [0], [0], [1], [0, 0, 1, 1], [], []>} : vector<8x64xf32>, vector<64x128xf32>, vector<8x128xf32> -> vector<8x128xf32>
    %5 = vector.broadcast %1 : vector<1x128xf32> to vector<8x128xf32>
    %6 = arith.addf %4, %5 : vector<8x128xf32>
    %cst_6 = arith.constant 0.000000e+00 : f32
    %7 = vector.broadcast %cst_6 : f32 to vector<8x128xf32>
    %8 = arith.maximumf %6, %7 : vector<8x128xf32>
    %c0_7 = arith.constant 0 : index
    %c0_8 = arith.constant 0 : index
    %9 = vector.load %arg2[%c0_7, %c0_8] : memref<8x8xf32, #tpu.memory_space<vmem>>, vector<8x1xf32>
    %10 = vector.broadcast %9 : vector<8x1xf32> to vector<8x128xf32>
    %11 = arith.mulf %10, %8 : vector<8x128xf32>
    %12 = arith.addf %2, %11 : vector<8x128xf32>
    %c0_9 = arith.constant 0 : index
    %c64 = arith.constant 64 : index
    %13 = vector.load %arg1[%c0_9, %c64] : memref<8x512xf32, #tpu.memory_space<vmem>>, vector<8x64xf32>
    %cst_10 = arith.constant dense<0.000000e+00> : vector<8x128xf32>
    %14 = tpu.matmul %13, %0, %cst_10 {dimension_numbers = #tpu.dot_dimension_numbers<[1], [0], [0], [1], [0, 0, 1, 1], [], []>} : vector<8x64xf32>, vector<64x128xf32>, vector<8x128xf32> -> vector<8x128xf32>
    %15 = vector.broadcast %1 : vector<1x128xf32> to vector<8x128xf32>
    %16 = arith.addf %14, %15 : vector<8x128xf32>
    %cst_11 = arith.constant 0.000000e+00 : f32
    %17 = vector.broadcast %cst_11 : f32 to vector<8x128xf32>
    %18 = arith.maximumf %16, %17 : vector<8x128xf32>
    %c0_12 = arith.constant 0 : index
    %c1 = arith.constant 1 : index
    %19 = vector.load %arg2[%c0_12, %c1] : memref<8x8xf32, #tpu.memory_space<vmem>>, vector<8x1xf32>
    %20 = vector.broadcast %19 : vector<8x1xf32> to vector<8x128xf32>
    %21 = arith.mulf %20, %18 : vector<8x128xf32>
    %22 = arith.addf %12, %21 : vector<8x128xf32>
    %c0_13 = arith.constant 0 : index
    %c128 = arith.constant 128 : index
    %23 = vector.load %arg1[%c0_13, %c128] : memref<8x512xf32, #tpu.memory_space<vmem>>, vector<8x64xf32>
    %cst_14 = arith.constant dense<0.000000e+00> : vector<8x128xf32>
    %24 = tpu.matmul %23, %0, %cst_14 {dimension_numbers = #tpu.dot_dimension_numbers<[1], [0], [0], [1], [0, 0, 1, 1], [], []>} : vector<8x64xf32>, vector<64x128xf32>, vector<8x128xf32> -> vector<8x128xf32>
    %25 = vector.broadcast %1 : vector<1x128xf32> to vector<8x128xf32>
    %26 = arith.addf %24, %25 : vector<8x128xf32>
    %cst_15 = arith.constant 0.000000e+00 : f32
    %27 = vector.broadcast %cst_15 : f32 to vector<8x128xf32>
    %28 = arith.maximumf %26, %27 : vector<8x128xf32>
    %c0_16 = arith.constant 0 : index
    %c2 = arith.constant 2 : index
    %29 = vector.load %arg2[%c0_16, %c2] : memref<8x8xf32, #tpu.memory_space<vmem>>, vector<8x1xf32>
    %30 = vector.broadcast %29 : vector<8x1xf32> to vector<8x128xf32>
    %31 = arith.mulf %30, %28 : vector<8x128xf32>
    %32 = arith.addf %22, %31 : vector<8x128xf32>
    %c0_17 = arith.constant 0 : index
    %c192 = arith.constant 192 : index
    %33 = vector.load %arg1[%c0_17, %c192] : memref<8x512xf32, #tpu.memory_space<vmem>>, vector<8x64xf32>
    %cst_18 = arith.constant dense<0.000000e+00> : vector<8x128xf32>
    %34 = tpu.matmul %33, %0, %cst_18 {dimension_numbers = #tpu.dot_dimension_numbers<[1], [0], [0], [1], [0, 0, 1, 1], [], []>} : vector<8x64xf32>, vector<64x128xf32>, vector<8x128xf32> -> vector<8x128xf32>
    %35 = vector.broadcast %1 : vector<1x128xf32> to vector<8x128xf32>
    %36 = arith.addf %34, %35 : vector<8x128xf32>
    %cst_19 = arith.constant 0.000000e+00 : f32
    %37 = vector.broadcast %cst_19 : f32 to vector<8x128xf32>
    %38 = arith.maximumf %36, %37 : vector<8x128xf32>
    %c0_20 = arith.constant 0 : index
    %c3 = arith.constant 3 : index
    %39 = vector.load %arg2[%c0_20, %c3] : memref<8x8xf32, #tpu.memory_space<vmem>>, vector<8x1xf32>
    %40 = vector.broadcast %39 : vector<8x1xf32> to vector<8x128xf32>
    %41 = arith.mulf %40, %38 : vector<8x128xf32>
    %42 = arith.addf %32, %41 : vector<8x128xf32>
    %c0_21 = arith.constant 0 : index
    %c256 = arith.constant 256 : index
    %43 = vector.load %arg1[%c0_21, %c256] : memref<8x512xf32, #tpu.memory_space<vmem>>, vector<8x64xf32>
    %cst_22 = arith.constant dense<0.000000e+00> : vector<8x128xf32>
    %44 = tpu.matmul %43, %0, %cst_22 {dimension_numbers = #tpu.dot_dimension_numbers<[1], [0], [0], [1], [0, 0, 1, 1], [], []>} : vector<8x64xf32>, vector<64x128xf32>, vector<8x128xf32> -> vector<8x128xf32>
    %45 = vector.broadcast %1 : vector<1x128xf32> to vector<8x128xf32>
    %46 = arith.addf %44, %45 : vector<8x128xf32>
    %cst_23 = arith.constant 0.000000e+00 : f32
    %47 = vector.broadcast %cst_23 : f32 to vector<8x128xf32>
    %48 = arith.maximumf %46, %47 : vector<8x128xf32>
    %c0_24 = arith.constant 0 : index
    %c4 = arith.constant 4 : index
    %49 = vector.load %arg2[%c0_24, %c4] : memref<8x8xf32, #tpu.memory_space<vmem>>, vector<8x1xf32>
    %50 = vector.broadcast %49 : vector<8x1xf32> to vector<8x128xf32>
    %51 = arith.mulf %50, %48 : vector<8x128xf32>
    %52 = arith.addf %42, %51 : vector<8x128xf32>
    %c0_25 = arith.constant 0 : index
    %c320 = arith.constant 320 : index
    %53 = vector.load %arg1[%c0_25, %c320] : memref<8x512xf32, #tpu.memory_space<vmem>>, vector<8x64xf32>
    %cst_26 = arith.constant dense<0.000000e+00> : vector<8x128xf32>
    %54 = tpu.matmul %53, %0, %cst_26 {dimension_numbers = #tpu.dot_dimension_numbers<[1], [0], [0], [1], [0, 0, 1, 1], [], []>} : vector<8x64xf32>, vector<64x128xf32>, vector<8x128xf32> -> vector<8x128xf32>
    %55 = vector.broadcast %1 : vector<1x128xf32> to vector<8x128xf32>
    %56 = arith.addf %54, %55 : vector<8x128xf32>
    %cst_27 = arith.constant 0.000000e+00 : f32
    %57 = vector.broadcast %cst_27 : f32 to vector<8x128xf32>
    %58 = arith.maximumf %56, %57 : vector<8x128xf32>
    %c0_28 = arith.constant 0 : index
    %c5 = arith.constant 5 : index
    %59 = vector.load %arg2[%c0_28, %c5] : memref<8x8xf32, #tpu.memory_space<vmem>>, vector<8x1xf32>
    %60 = vector.broadcast %59 : vector<8x1xf32> to vector<8x128xf32>
    %61 = arith.mulf %60, %58 : vector<8x128xf32>
    %62 = arith.addf %52, %61 : vector<8x128xf32>
    %c0_29 = arith.constant 0 : index
    %c384 = arith.constant 384 : index
    %63 = vector.load %arg1[%c0_29, %c384] : memref<8x512xf32, #tpu.memory_space<vmem>>, vector<8x64xf32>
    %cst_30 = arith.constant dense<0.000000e+00> : vector<8x128xf32>
    %64 = tpu.matmul %63, %0, %cst_30 {dimension_numbers = #tpu.dot_dimension_numbers<[1], [0], [0], [1], [0, 0, 1, 1], [], []>} : vector<8x64xf32>, vector<64x128xf32>, vector<8x128xf32> -> vector<8x128xf32>
    %65 = vector.broadcast %1 : vector<1x128xf32> to vector<8x128xf32>
    %66 = arith.addf %64, %65 : vector<8x128xf32>
    %cst_31 = arith.constant 0.000000e+00 : f32
    %67 = vector.broadcast %cst_31 : f32 to vector<8x128xf32>
    %68 = arith.maximumf %66, %67 : vector<8x128xf32>
    %c0_32 = arith.constant 0 : index
    %c6 = arith.constant 6 : index
    %69 = vector.load %arg2[%c0_32, %c6] : memref<8x8xf32, #tpu.memory_space<vmem>>, vector<8x1xf32>
    %70 = vector.broadcast %69 : vector<8x1xf32> to vector<8x128xf32>
    %71 = arith.mulf %70, %68 : vector<8x128xf32>
    %72 = arith.addf %62, %71 : vector<8x128xf32>
    %c0_33 = arith.constant 0 : index
    %c448 = arith.constant 448 : index
    %73 = vector.load %arg1[%c0_33, %c448] : memref<8x512xf32, #tpu.memory_space<vmem>>, vector<8x64xf32>
    %cst_34 = arith.constant dense<0.000000e+00> : vector<8x128xf32>
    %74 = tpu.matmul %73, %0, %cst_34 {dimension_numbers = #tpu.dot_dimension_numbers<[1], [0], [0], [1], [0, 0, 1, 1], [], []>} : vector<8x64xf32>, vector<64x128xf32>, vector<8x128xf32> -> vector<8x128xf32>
    %75 = vector.broadcast %1 : vector<1x128xf32> to vector<8x128xf32>
    %76 = arith.addf %74, %75 : vector<8x128xf32>
    %cst_35 = arith.constant 0.000000e+00 : f32
    %77 = vector.broadcast %cst_35 : f32 to vector<8x128xf32>
    %78 = arith.maximumf %76, %77 : vector<8x128xf32>
    %c0_36 = arith.constant 0 : index
    %c7 = arith.constant 7 : index
    %79 = vector.load %arg2[%c0_36, %c7] : memref<8x8xf32, #tpu.memory_space<vmem>>, vector<8x1xf32>
    %80 = vector.broadcast %79 : vector<8x1xf32> to vector<8x128xf32>
    %81 = arith.mulf %80, %78 : vector<8x128xf32>
    %82 = arith.addf %72, %81 : vector<8x128xf32>
    %c0_37 = arith.constant 0 : index
    %c0_38 = arith.constant 0 : index
    %83 = vector.load %arg5[%c0_37, %c0_38] : memref<128x128xf32, #tpu.memory_space<vmem>>, vector<128x128xf32>
    %cst_39 = arith.constant dense<0.000000e+00> : vector<8x128xf32>
    %84 = tpu.matmul %82, %83, %cst_39 {dimension_numbers = #tpu.dot_dimension_numbers<[1], [0], [0], [1], [0, 0, 1, 1], [], []>} : vector<8x128xf32>, vector<128x128xf32>, vector<8x128xf32> -> vector<8x128xf32>
    %c0_40 = arith.constant 0 : index
    %c0_41 = arith.constant 0 : index
    %85 = vector.load %arg6[%c0_40, %c0_41] : memref<1x128xf32, #tpu.memory_space<vmem>>, vector<1x128xf32>
    %86 = vector.broadcast %85 : vector<1x128xf32> to vector<8x128xf32>
    %87 = arith.addf %84, %86 : vector<8x128xf32>
    %c0_42 = arith.constant 0 : index
    %c0_43 = arith.constant 0 : index
    %88 = vector.load %arg7[%c0_42, %c0_43] : memref<8x128xf32, #tpu.memory_space<vmem>>, vector<8x128xf32>
    tpu.vector_store %arg7[%c0_42, %c0_43], %87 {strides = array<i32>} : memref<8x128xf32, #tpu.memory_space<vmem>>, vector<8x128xf32>,
    return
  }
  func.func @transform_0(%arg0: i32) -> (i32, i32) {
    %c0_i32 = arith.constant 0 : i32
    %c0_i32_0 = arith.constant 0 : i32
    return %arg0, %c0_i32 : i32, i32
  }
  func.func @transform_1(%arg0: i32) -> (i32, i32) {
    %c0_i32 = arith.constant 0 : i32
    %c0_i32_0 = arith.constant 0 : i32
    return %arg0, %c0_i32 : i32, i32
  }
  func.func @transform_2(%arg0: i32) -> (i32, i32) {
    %c0_i32 = arith.constant 0 : i32
    %c0_i32_0 = arith.constant 0 : i32
    %c0_i32_1 = arith.constant 0 : i32
    return %c0_i32, %c0_i32_0 : i32, i32
  }
  func.func @transform_3(%arg0: i32) -> (i32, i32) {
    %c0_i32 = arith.constant 0 : i32
    %c0_i32_0 = arith.constant 0 : i32
    %c0_i32_1 = arith.constant 0 : i32
    return %c0_i32, %c0_i32_0 : i32, i32
  }
  func.func @transform_4(%arg0: i32) -> (i32, i32) {
    %c0_i32 = arith.constant 0 : i32
    %c0_i32_0 = arith.constant 0 : i32
    %c0_i32_1 = arith.constant 0 : i32
    return %c0_i32, %c0_i32_0 : i32, i32
  }
  func.func @transform_5(%arg0: i32) -> (i32, i32) {
    %c0_i32 = arith.constant 0 : i32
    %c0_i32_0 = arith.constant 0 : i32
    %c0_i32_1 = arith.constant 0 : i32
    return %c0_i32, %c0_i32_0 : i32, i32
  }
  func.func @transform_6(%arg0: i32) -> (i32, i32) {
    %c0_i32 = arith.constant 0 : i32
    %c0_i32_0 = arith.constant 0 : i32
    return %arg0, %c0_i32 : i32, i32
  }
}

</mosaic_0001>

<llo_original>
// kernel: tpu_custom_call.1
$region0: #{tpu_custom_call.1}
  #allocation0 [shape = 'u32[]', space=smem, size = 0x4, offset = 0x4, fixed_abs, tag = 'smem constant byte address 0x4 - core index']
  #allocation1 [shape = 'u32[144,128]{1,0:T(1,128)}', space=vmem, size = 0x12000, scoped, tag = 'internal scratch']
  %s0 = inlined_call_operand.hbm [shape: f32[8,512], index: 0, kind: input, shape index: {}]
  %s1 = inlined_call_operand.hbm [shape: f32[8,8], index: 1, kind: input, shape index: {}]
  %s2 = inlined_call_operand.hbm [shape: f32[64,128], index: 2, kind: input, shape index: {}]
  %s3 = inlined_call_operand.vmem [shape: f32[1,128], index: 3, kind: input, shape index: {}]
  %s4 = inlined_call_operand.hbm [shape: f32[128,128], index: 4, kind: input, shape index: {}]
  %s5 = inlined_call_operand.vmem [shape: f32[1,128], index: 5, kind: input, shape index: {}]
  %s6 = inlined_call_operand.hbm [shape: f32[8,128], index: 6, kind: output, shape index: {}]
  %s7 = sld [smem:[#allocation0]]
  $region50: #{tpu_custom_call.1} parent=0
    _
  %s9 = ssub.s32 1, %s7
  %s10 = scalar_select 0, %s9, %s7
  $region1: #{tpu_custom_call.1} parent=0
    #allocation2 [shape = 'u8[16384]{0}', space=vmem, size = 0x4000, scoped, tag = 'input window, operand 0, single buffered']
    #allocation3 [shape = 's32[1]{0}', space=sflag, size = 0x4, scoped, tag = 'scoped memory for tpu_custom_call.1']
    #allocation4 [shape = 's32[1]{0}', space=sflag, size = 0x4, scoped, tag = 'scoped memory for tpu_custom_call.1']
    #allocation5 [shape = 'u8[4096]{0}', space=vmem, size = 0x1000, scoped, tag = 'input window, operand 1, single buffered']
    #allocation6 [shape = 's32[1]{0}', space=sflag, size = 0x4, scoped, tag = 'scoped memory for tpu_custom_call.1']
    #allocation7 [shape = 'u8[32768]{0}', space=vmem, size = 0x8000, scoped, tag = 'input window, operand 2, single buffered']
    #allocation8 [shape = 'u8[65536]{0}', space=vmem, size = 0x10000, scoped, tag = 'input window, operand 4, single buffered']
    #allocation9 [shape = 's32[1]{0}', space=sflag, size = 0x4, scoped, tag = 'scoped memory for tpu_custom_call.1']
    #allocation10 [shape = 'u8[4096]{0}', space=vmem, size = 0x1000, scoped, tag = 'output window, operand 0, single buffered']
    %11 = vsyncpa [#allocation3], 0
    %12 = vsyncpa [#allocation6], 0
    %13 = vsyncpa [#allocation9], 0
    %14 = vsyncpa [#allocation4], 0
    // Predicated region
    $region2: #{tpu_custom_call.1} parent=1 // pred_check
      _
    $region3: #{tpu_custom_call.1} parent=1 // pred_check_branch
      %16 = sbr.rel (0) target = $region5
    $region4: #{tpu_custom_call.1} parent=1 // pred_region
      %s18 = ssub.s32 512, 512
      %19 = vsyncadd [#allocation3], %s18
      %s21 = sshll.u32 [#allocation2], 4
      %s22 = int_to_ptr.vmem [resolvable:$true] %s21
      %24 = dma.hbm_to_vmem [thread:$0]  %s0, 512, %s22, [#allocation3]
    $region5: #{tpu_custom_call.1} parent=1 // pred_fallthru
      _
    // Predicated region
    $region6: #{tpu_custom_call.1} parent=1 // pred_check
      _
    $region7: #{tpu_custom_call.1} parent=1 // pred_check_branch
      %26 = sbr.rel (0) target = $region9
    $region8: #{tpu_custom_call.1} parent=1 // pred_region
      %s28 = ssub.s32 128, 128
      %29 = vsyncadd [#allocation6], %s28
      %s31 = sshll.u32 [#allocation5], 4
      %s32 = int_to_ptr.vmem [resolvable:$true] %s31
      %34 = dma.hbm_to_vmem [thread:$0]  %s1, 128, %s32, [#allocation6]
    $region9: #{tpu_custom_call.1} parent=1 // pred_fallthru
      _
    // Predicated region
    $region10: #{tpu_custom_call.1} parent=1 // pred_check
      _
    $region11: #{tpu_custom_call.1} parent=1 // pred_check_branch
      %36 = sbr.rel (0) target = $region13
    $region12: #{tpu_custom_call.1} parent=1 // pred_region
      %s38 = ssub.s32 1024, 1024
      %39 = vsyncadd [#allocation6], %s38
      %s40 = sshll.u32 [#allocation7], 4
      %s41 = int_to_ptr.vmem [resolvable:$true] %s40
      %46 = dma.hbm_to_vmem [thread:$0]  %s2, 1024, %s41, [#allocation6], 128, 128, 8
    $region13: #{tpu_custom_call.1} parent=1 // pred_fallthru
      _
    // Predicated region
    $region14: #{tpu_custom_call.1} parent=1 // pred_check
      _
    $region15: #{tpu_custom_call.1} parent=1 // pred_check_branch
      %48 = sbr.rel (0) target = $region17
    $region16: #{tpu_custom_call.1} parent=1 // pred_region
      _
    $region17: #{tpu_custom_call.1} parent=1 // pred_fallthru
      _
    // Predicated region
    $region18: #{tpu_custom_call.1} parent=1 // pred_check
      _
    $region19: #{tpu_custom_call.1} parent=1 // pred_check_branch
      %50 = sbr.rel (0) target = $region21
    $region20: #{tpu_custom_call.1} parent=1 // pred_region
      %s52 = ssub.s32 2048, 2048
      %53 = vsyncadd [#allocation9], %s52
      %s54 = sshll.u32 [#allocation8], 4
      %s55 = int_to_ptr.vmem [resolvable:$true] %s54
      %60 = dma.hbm_to_vmem [thread:$0]  %s4, 2048, %s55, [#allocation9], 128, 128, 8
    $region21: #{tpu_custom_call.1} parent=1 // pred_fallthru
      _
    // Predicated region
    $region22: #{tpu_custom_call.1} parent=1 // pred_check
      _
    $region23: #{tpu_custom_call.1} parent=1 // pred_check_branch
      %62 = sbr.rel (0) target = $region25
    $region24: #{tpu_custom_call.1} parent=1 // pred_region
      _
    $region25: #{tpu_custom_call.1} parent=1 // pred_fallthru
      _
    // Predicated region
    $region26: #{tpu_custom_call.1} parent=1 // pred_check
      _
    $region27: #{tpu_custom_call.1} parent=1 // pred_check_branch
      %64 = sbr.rel (0) target = $region29
    $region28: #{tpu_custom_call.1} parent=1 // pred_region
      %65 = dma.done [#allocation3], 512
    $region29: #{tpu_custom_call.1} parent=1 // pred_fallthru
      _
    // Predicated region
    $region30: #{tpu_custom_call.1} parent=1 // pred_check
      _
    $region31: #{tpu_custom_call.1} parent=1 // pred_check_branch
      %67 = sbr.rel (0) target = $region33
    $region32: #{tpu_custom_call.1} parent=1 // pred_region
      %68 = dma.done [#allocation6], 128
    $region33: #{tpu_custom_call.1} parent=1 // pred_fallthru
      _
    // Predicated region
    $region34: #{tpu_custom_call.1} parent=1 // pred_check
      _
    $region35: #{tpu_custom_call.1} parent=1 // pred_check_branch
      %70 = sbr.rel (0) target = $region37
    $region36: #{tpu_custom_call.1} parent=1 // pred_region
      %71 = dma.done [#allocation6], 1024
    $region37: #{tpu_custom_call.1} parent=1 // pred_fallthru
      _
    // Predicated region
    $region38: #{tpu_custom_call.1} parent=1 // pred_check
      _
    $region39: #{tpu_custom_call.1} parent=1 // pred_check_branch
      %73 = sbr.rel (0) target = $region41
    $region40: #{tpu_custom_call.1} parent=1 // pred_region
      %74 = dma.done [#allocation9], 2048
    $region41: #{tpu_custom_call.1} parent=1 // pred_fallthru
      _
    %v75 = vld [vmem:[#allocation7] sm:$0xff]
    %v76 = vld [vmem:[#allocation7 + $0x8] sm:$0xff]
    %v77 = vld [vmem:[#allocation7 + $0x10] sm:$0xff]
    %v78 = vld [vmem:[#allocation7 + $0x18] sm:$0xff]
    %v79 = vld [vmem:[#allocation7 + $0x20] sm:$0xff]
    %v80 = vld [vmem:[#allocation7 + $0x28] sm:$0xff]
    %v81 = vld [vmem:[#allocation7 + $0x30] sm:$0xff]
    %v82 = vld [vmem:[#allocation7 + $0x38] sm:$0xff]
    %v83 = vld [vmem:[%s3] sm:$0x1]
    %v84 = vld [vmem:[#allocation2] sm:$0xff]
    %v86 = vlaneseq
    %v87 = vshrl.u32 %v86, 7
    %v88 = vsub.s32 0, %v87
    %v89 = vrot.slane %v83, %v88
    %vm91 = vcmask 523264
    %v93 = vsel %vm91, %v84, 0
    %95 = vmatprep.subr.mxu0 0.0
    %96 = vmatpush1.msra.mxu0 %v75
    %97 = vmatprep.subr.mxu0 0.0
    %98 = vmatpush1.msra.mxu0 %v76
    %99 = vmatprep.subr.mxu0 0.0
    %100 = vmatpush1.msra.mxu0 %v77
    %101 = vmatprep.subr.mxu0 0.0
    %102 = vmatpush1.msra.mxu0 %v78
    %103 = vmatprep.subr.mxu0 0.0
    %104 = vmatpush1.msra.mxu0 %v79
    %105 = vmatprep.subr.mxu0 0.0
    %106 = vmatpush1.msra.mxu0 %v80
    %107 = vmatprep.subr.mxu0 0.0
    %108 = vmatpush1.msra.mxu0 %v81
    %109 = vmatprep.subr.mxu0 0.0
    %110 = vmatpush1.msra.mxu0 %v82
    %111 = vmatprep.subr.mxu0 0.0
    %112 = vmatpush1.msra.mxu0 0.0
    %113 = vmatprep.subr.mxu0 0.0
    %114 = vmatpush1.msra.mxu0 0.0
    %115 = vmatprep.subr.mxu0 0.0
    %116 = vmatpush1.msra.mxu0 0.0
    %117 = vmatprep.subr.mxu0 0.0
    %118 = vmatpush1.msra.mxu0 0.0
    %119 = vmatprep.subr.mxu0 0.0
    %120 = vmatpush1.msra.mxu0 0.0
    %121 = vmatprep.subr.mxu0 0.0
    %122 = vmatpush1.msra.mxu0 0.0
    %123 = vmatprep.subr.mxu0 0.0
    %124 = vmatpush1.msra.mxu0 0.0
    %125 = vmatprep.subr.mxu0 0.0
    %126 = vmatpush1.msra.mxu0 0.0
    %127 = vmatprep.subr.mxu0 0.0
    %128 = vmatpush1.msra.mxu0 0.0
    %129 = vmatprep.subr.mxu0 0.0
    %130 = vmatpush1.msra.mxu0 0.0
    %131 = vmatprep.subr.mxu0 0.0
    %132 = vmatpush1.msra.mxu0 0.0
    %133 = vmatprep.subr.mxu0 0.0
    %134 = vmatpush1.msra.mxu0 0.0
    %135 = vmatprep.subr.mxu0 0.0
    %136 = vmatpush1.msra.mxu0 0.0
    %137 = vmatprep.subr.mxu0 0.0
    %138 = vmatpush1.msra.mxu0 0.0
    %139 = vmatprep.subr.mxu0 0.0
    %140 = vmatpush1.msra.mxu0 0.0
    %141 = vmatprep.subr.mxu0 0.0
    %142 = vmatpush1.msra.mxu0 0.0
    %143 = vmatprep.subr.mxu0 0.0
    %144 = vmatpush1.msra.mxu0 0.0
    %145 = vmatprep.subr.mxu0 0.0
    %146 = vmatpush1.msra.mxu0 0.0
    %147 = vmatprep.subr.mxu0 0.0
    %148 = vmatpush1.msra.mxu0 0.0
    %149 = vmatprep.subr.mxu0 0.0
    %150 = vmatpush1.msra.mxu0 0.0
    %151 = vmatprep.subr.mxu0 0.0
    %152 = vmatpush1.msra.mxu0 0.0
    %153 = vmatprep.subr.mxu0 0.0
    %154 = vmatpush1.msra.mxu0 0.0
    %155 = vmatprep.subr.mxu0 0.0
    %156 = vmatpush1.msra.mxu0 0.0
    %157 = vmatprep.subr.mxu0 0.0
    %158 = vmatpush1.msra.mxu0 0.0
    %159 = vmatprep.mubr.f32.mxu0 0.0
    %160 = vmatmul.mubr.f32.gmra.mrb[0].mxu0 %v93
    %v161 = vpop.f32.mrb[0].mxu0
    %v162 = vadd.f32 %v89, %v161
    %v163 = vpop.f32.mrb[0].mxu0
    %164 = vdwg.mxu0
    %v165 = vmax.f32 %v162, 0.0
    %v166 = vld [vmem:[#allocation5] sm:$0xff]
    %168 = vset.pattern.permute.xlu0 0
    %169 = vperm.xlu0 %168, %v166
    %v170 = vpop.permute.xlu0 %169
    %v172 = vmul.f32 %v170, %v165
    %v173 = vadd.f32 %v172, 0.0
    %174 = vrot.lane.b32.xlu0 %v84, 64
    %v175 = vpop.permute.xlu0 %174
    %v176 = vsel %vm91, %v175, 0
    %178 = vmatprep.subr.mxu0 0.0
    %179 = vmatpush1.msra.mxu0 %v75
    %180 = vmatprep.subr.mxu0 0.0
    %181 = vmatpush1.msra.mxu0 %v76
    %182 = vmatprep.subr.mxu0 0.0
    %183 = vmatpush1.msra.mxu0 %v77
    %184 = vmatprep.subr.mxu0 0.0
    %185 = vmatpush1.msra.mxu0 %v78
    %186 = vmatprep.subr.mxu0 0.0
    %187 = vmatpush1.msra.mxu0 %v79
    %188 = vmatprep.subr.mxu0 0.0
    %189 = vmatpush1.msra.mxu0 %v80
    %190 = vmatprep.subr.mxu0 0.0
    %191 = vmatpush1.msra.mxu0 %v81
    %192 = vmatprep.subr.mxu0 0.0
    %193 = vmatpush1.msra.mxu0 %v82
    %194 = vmatprep.subr.mxu0 0.0
    %195 = vmatpush1.msra.mxu0 0.0
    %196 = vmatprep.subr.mxu0 0.0
    %197 = vmatpush1.msra.mxu0 0.0
    %198 = vmatprep.subr.mxu0 0.0
    %199 = vmatpush1.msra.mxu0 0.0
    %200 = vmatprep.subr.mxu0 0.0
    %201 = vmatpush1.msra.mxu0 0.0
    %202 = vmatprep.subr.mxu0 0.0
    %203 = vmatpush1.msra.mxu0 0.0
    %204 = vmatprep.subr.mxu0 0.0
    %205 = vmatpush1.msra.mxu0 0.0
    %206 = vmatprep.subr.mxu0 0.0
    %207 = vmatpush1.msra.mxu0 0.0
    %208 = vmatprep.subr.mxu0 0.0
    %209 = vmatpush1.msra.mxu0 0.0
    %210 = vmatprep.subr.mxu0 0.0
    %211 = vmatpush1.msra.mxu0 0.0
    %212 = vmatprep.subr.mxu0 0.0
    %213 = vmatpush1.msra.mxu0 0.0
    %214 = vmatprep.subr.mxu0 0.0
    %215 = vmatpush1.msra.mxu0 0.0
    %216 = vmatprep.subr.mxu0 0.0
    %217 = vmatpush1.msra.mxu0 0.0
    %218 = vmatprep.subr.mxu0 0.0
    %219 = vmatpush1.msra.mxu0 0.0
    %220 = vmatprep.subr.mxu0 0.0
    %221 = vmatpush1.msra.mxu0 0.0
    %222 = vmatprep.subr.mxu0 0.0
    %223 = vmatpush1.msra.mxu0 0.0
    %224 = vmatprep.subr.mxu0 0.0
    %225 = vmatpush1.msra.mxu0 0.0
    %226 = vmatprep.subr.mxu0 0.0
    %227 = vmatpush1.msra.mxu0 0.0
    %228 = vmatprep.subr.mxu0 0.0
    %229 = vmatpush1.msra.mxu0 0.0
    %230 = vmatprep.subr.mxu0 0.0
    %231 = vmatpush1.msra.mxu0 0.0
    %232 = vmatprep.subr.mxu0 0.0
    %233 = vmatpush1.msra.mxu0 0.0
    %234 = vmatprep.subr.mxu0 0.0
    %235 = vmatpush1.msra.mxu0 0.0
    %236 = vmatprep.subr.mxu0 0.0
    %237 = vmatpush1.msra.mxu0 0.0
    %238 = vmatprep.subr.mxu0 0.0
    %239 = vmatpush1.msra.mxu0 0.0
    %240 = vmatprep.subr.mxu0 0.0
    %241 = vmatpush1.msra.mxu0 0.0
    %242 = vmatprep.mubr.f32.mxu0 0.0
    %243 = vmatmul.mubr.f32.gmra.mrb[0].mxu0 %v176
    %v244 = vpop.f32.mrb[0].mxu0
    %v245 = vadd.f32 %v89, %v244
    %v246 = vpop.f32.mrb[0].mxu0
    %247 = vdwg.mxu0
    %v248 = vmax.f32 %v245, 0.0
    %249 = vset.pattern.permute.xlu0 1
    %250 = vperm.xlu0 %249, %v166
    %v251 = vpop.permute.xlu0 %250
    %v253 = vmul.f32 %v251, %v248
    %v254 = vadd.f32 %v173, %v253
    %v255 = vld [vmem:[#allocation2 + $0x8] sm:$0xff]
    %v257 = vsel %vm91, %v255, 0
    %259 = vmatprep.subr.mxu0 0.0
    %260 = vmatpush1.msra.mxu0 %v75
    %261 = vmatprep.subr.mxu0 0.0
    %262 = vmatpush1.msra.mxu0 %v76
    %263 = vmatprep.subr.mxu0 0.0
    %264 = vmatpush1.msra.mxu0 %v77
    %265 = vmatprep.subr.mxu0 0.0
    %266 = vmatpush1.msra.mxu0 %v78
    %267 = vmatprep.subr.mxu0 0.0
    %268 = vmatpush1.msra.mxu0 %v79
    %269 = vmatprep.subr.mxu0 0.0
    %270 = vmatpush1.msra.mxu0 %v80
    %271 = vmatprep.subr.mxu0 0.0
    %272 = vmatpush1.msra.mxu0 %v81
    %273 = vmatprep.subr.mxu0 0.0
    %274 = vmatpush1.msra.mxu0 %v82
    %275 = vmatprep.subr.mxu0 0.0
    %276 = vmatpush1.msra.mxu0 0.0
    %277 = vmatprep.subr.mxu0 0.0
    %278 = vmatpush1.msra.mxu0 0.0
    %279 = vmatprep.subr.mxu0 0.0
    %280 = vmatpush1.msra.mxu0 0.0
    %281 = vmatprep.subr.mxu0 0.0
    %282 = vmatpush1.msra.mxu0 0.0
    %283 = vmatprep.subr.mxu0 0.0
    %284 = vmatpush1.msra.mxu0 0.0
    %285 = vmatprep.subr.mxu0 0.0
    %286 = vmatpush1.msra.mxu0 0.0
    %287 = vmatprep.subr.mxu0 0.0
    %288 = vmatpush1.msra.mxu0 0.0
    %289 = vmatprep.subr.mxu0 0.0
    %290 = vmatpush1.msra.mxu0 0.0
    %291 = vmatprep.subr.mxu0 0.0
    %292 = vmatpush1.msra.mxu0 0.0
    %293 = vmatprep.subr.mxu0 0.0
    %294 = vmatpush1.msra.mxu0 0.0
    %295 = vmatprep.subr.mxu0 0.0
    %296 = vmatpush1.msra.mxu0 0.0
    %297 = vmatprep.subr.mxu0 0.0
    %298 = vmatpush1.msra.mxu0 0.0
    %299 = vmatprep.subr.mxu0 0.0
    %300 = vmatpush1.msra.mxu0 0.0
    %301 = vmatprep.subr.mxu0 0.0
    %302 = vmatpush1.msra.mxu0 0.0
    %303 = vmatprep.subr.mxu0 0.0
    %304 = vmatpush1.msra.mxu0 0.0
    %305 = vmatprep.subr.mxu0 0.0
    %306 = vmatpush1.msra.mxu0 0.0
    %307 = vmatprep.subr.mxu0 0.0
    %308 = vmatpush1.msra.mxu0 0.0
    %309 = vmatprep.subr.mxu0 0.0
    %310 = vmatpush1.msra.mxu0 0.0
    %311 = vmatprep.subr.mxu0 0.0
    %312 = vmatpush1.msra.mxu0 0.0
    %313 = vmatprep.subr.mxu0 0.0
    %314 = vmatpush1.msra.mxu0 0.0
    %315 = vmatprep.subr.mxu0 0.0
    %316 = vmatpush1.msra.mxu0 0.0
    %317 = vmatprep.subr.mxu0 0.0
    %318 = vmatpush1.msra.mxu0 0.0
    %319 = vmatprep.subr.mxu0 0.0
    %320 = vmatpush1.msra.mxu0 0.0
    %321 = vmatprep.subr.mxu0 0.0
    %322 = vmatpush1.msra.mxu0 0.0
    %323 = vmatprep.mubr.f32.mxu0 0.0
    %324 = vmatmul.mubr.f32.gmra.mrb[0].mxu0 %v257
    %v325 = vpop.f32.mrb[0].mxu0
    %v326 = vadd.f32 %v89, %v325
    %v327 = vpop.f32.mrb[0].mxu0
    %328 = vdwg.mxu0
    %v329 = vmax.f32 %v326, 0.0
    %330 = vset.pattern.permute.xlu0 2
    %331 = vperm.xlu0 %330, %v166
    %v332 = vpop.permute.xlu0 %331
    %v334 = vmul.f32 %v332, %v329
    %v335 = vadd.f32 %v254, %v334
    %336 = vrot.lane.b32.xlu0 %v255, 64
    %v337 = vpop.permute.xlu0 %336
    %v338 = vsel %vm91, %v337, 0
    %340 = vmatprep.subr.mxu0 0.0
    %341 = vmatpush1.msra.mxu0 %v75
    %342 = vmatprep.subr.mxu0 0.0
    %343 = vmatpush1.msra.mxu0 %v76
    %344 = vmatprep.subr.mxu0 0.0
    %345 = vmatpush1.msra.mxu0 %v77
    %346 = vmatprep.subr.mxu0 0.0
    %347 = vmatpush1.msra.mxu0 %v78
    %348 = vmatprep.subr.mxu0 0.0
    %349 = vmatpush1.msra.mxu0 %v79
    %350 = vmatprep.subr.mxu0 0.0
    %351 = vmatpush1.msra.mxu0 %v80
    %352 = vmatprep.subr.mxu0 0.0
    %353 = vmatpush1.msra.mxu0 %v81
    %354 = vmatprep.subr.mxu0 0.0
    %355 = vmatpush1.msra.mxu0 %v82
    %356 = vmatprep.subr.mxu0 0.0
    %357 = vmatpush1.msra.mxu0 0.0
    %358 = vmatprep.subr.mxu0 0.0
    %359 = vmatpush1.msra.mxu0 0.0
    %360 = vmatprep.subr.mxu0 0.0
    %361 = vmatpush1.msra.mxu0 0.0
    %362 = vmatprep.subr.mxu0 0.0
    %363 = vmatpush1.msra.mxu0 0.0
    %364 = vmatprep.subr.mxu0 0.0
    %365 = vmatpush1.msra.mxu0 0.0
    %366 = vmatprep.subr.mxu0 0.0
    %367 = vmatpush1.msra.mxu0 0.0
    %368 = vmatprep.subr.mxu0 0.0
    %369 = vmatpush1.msra.mxu0 0.0
    %370 = vmatprep.subr.mxu0 0.0
    %371 = vmatpush1.msra.mxu0 0.0
    %372 = vmatprep.subr.mxu0 0.0
    %373 = vmatpush1.msra.mxu0 0.0
    %374 = vmatprep.subr.mxu0 0.0
    %375 = vmatpush1.msra.mxu0 0.0
    %376 = vmatprep.subr.mxu0 0.0
    %377 = vmatpush1.msra.mxu0 0.0
    %378 = vmatprep.subr.mxu0 0.0
    %379 = vmatpush1.msra.mxu0 0.0
    %380 = vmatprep.subr.mxu0 0.0
    %381 = vmatpush1.msra.mxu0 0.0
    %382 = vmatprep.subr.mxu0 0.0
    %383 = vmatpush1.msra.mxu0 0.0
    %384 = vmatprep.subr.mxu0 0.0
    %385 = vmatpush1.msra.mxu0 0.0
    %386 = vmatprep.subr.mxu0 0.0
    %387 = vmatpush1.msra.mxu0 0.0
    %388 = vmatprep.subr.mxu0 0.0
    %389 = vmatpush1.msra.mxu0 0.0
    %390 = vmatprep.subr.mxu0 0.0
    %391 = vmatpush1.msra.mxu0 0.0
    %392 = vmatprep.subr.mxu0 0.0
    %393 = vmatpush1.msra.mxu0 0.0
    %394 = vmatprep.subr.mxu0 0.0
    %395 = vmatpush1.msra.mxu0 0.0
    %396 = vmatprep.subr.mxu0 0.0
    %397 = vmatpush1.msra.mxu0 0.0
    %398 = vmatprep.subr.mxu0 0.0
    %399 = vmatpush1.msra.mxu0 0.0
    %400 = vmatprep.subr.mxu0 0.0
    %401 = vmatpush1.msra.mxu0 0.0
    %402 = vmatprep.subr.mxu0 0.0
    %403 = vmatpush1.msra.mxu0 0.0
    %404 = vmatprep.mubr.f32.mxu0 0.0
    %405 = vmatmul.mubr.f32.gmra.mrb[0].mxu0 %v338
    %v406 = vpop.f32.mrb[0].mxu0
    %v407 = vadd.f32 %v89, %v406
    %v408 = vpop.f32.mrb[0].mxu0
    %409 = vdwg.mxu0
    %v410 = vmax.f32 %v407, 0.0
    %411 = vset.pattern.permute.xlu0 3
    %412 = vperm.xlu0 %411, %v166
    %v413 = vpop.permute.xlu0 %412
    %v415 = vmul.f32 %v413, %v410
    %v416 = vadd.f32 %v335, %v415
    %v417 = vld [vmem:[#allocation2 + $0x10] sm:$0xff]
    %v419 = vsel %vm91, %v417, 0
    %421 = vmatprep.subr.mxu0 0.0
    %422 = vmatpush1.msra.mxu0 %v75
    %423 = vmatprep.subr.mxu0 0.0
    %424 = vmatpush1.msra.mxu0 %v76
    %425 = vmatprep.subr.mxu0 0.0
    %426 = vmatpush1.msra.mxu0 %v77
    %427 = vmatprep.subr.mxu0 0.0
    %428 = vmatpush1.msra.mxu0 %v78
    %429 = vmatprep.subr.mxu0 0.0
    %430 = vmatpush1.msra.mxu0 %v79
    %431 = vmatprep.subr.mxu0 0.0
    %432 = vmatpush1.msra.mxu0 %v80
    %433 = vmatprep.subr.mxu0 0.0
    %434 = vmatpush1.msra.mxu0 %v81
    %435 = vmatprep.subr.mxu0 0.0
    %436 = vmatpush1.msra.mxu0 %v82
    %437 = vmatprep.subr.mxu0 0.0
    %438 = vmatpush1.msra.mxu0 0.0
    %439 = vmatprep.subr.mxu0 0.0
    %440 = vmatpush1.msra.mxu0 0.0
    %441 = vmatprep.subr.mxu0 0.0
    %442 = vmatpush1.msra.mxu0 0.0
    %443 = vmatprep.subr.mxu0 0.0
    %444 = vmatpush1.msra.mxu0 0.0
    %445 = vmatprep.subr.mxu0 0.0
    %446 = vmatpush1.msra.mxu0 0.0
    %447 = vmatprep.subr.mxu0 0.0
    %448 = vmatpush1.msra.mxu0 0.0
    %449 = vmatprep.subr.mxu0 0.0
    %450 = vmatpush1.msra.mxu0 0.0
    %451 = vmatprep.subr.mxu0 0.0
    %452 = vmatpush1.msra.mxu0 0.0
    %453 = vmatprep.subr.mxu0 0.0
    %454 = vmatpush1.msra.mxu0 0.0
    %455 = vmatprep.subr.mxu0 0.0
    %456 = vmatpush1.msra.mxu0 0.0
    %457 = vmatprep.subr.mxu0 0.0
    %458 = vmatpush1.msra.mxu0 0.0
    %459 = vmatprep.subr.mxu0 0.0
    %460 = vmatpush1.msra.mxu0 0.0
    %461 = vmatprep.subr.mxu0 0.0
    %462 = vmatpush1.msra.mxu0 0.0
    %463 = vmatprep.subr.mxu0 0.0
    %464 = vmatpush1.msra.mxu0 0.0
    %465 = vmatprep.subr.mxu0 0.0
    %466 = vmatpush1.msra.mxu0 0.0
    %467 = vmatprep.subr.mxu0 0.0
    %468 = vmatpush1.msra.mxu0 0.0
    %469 = vmatprep.subr.mxu0 0.0
    %470 = vmatpush1.msra.mxu0 0.0
    %471 = vmatprep.subr.mxu0 0.0
    %472 = vmatpush1.msra.mxu0 0.0
    %473 = vmatprep.subr.mxu0 0.0
    %474 = vmatpush1.msra.mxu0 0.0
    %475 = vmatprep.subr.mxu0 0.0
    %476 = vmatpush1.msra.mxu0 0.0
    %477 = vmatprep.subr.mxu0 0.0
    %478 = vmatpush1.msra.mxu0 0.0
    %479 = vmatprep.subr.mxu0 0.0
    %480 = vmatpush1.msra.mxu0 0.0
    %481 = vmatprep.subr.mxu0 0.0
    %482 = vmatpush1.msra.mxu0 0.0
    %483 = vmatprep.subr.mxu0 0.0
    %484 = vmatpush1.msra.mxu0 0.0
    %485 = vmatprep.mubr.f32.mxu0 0.0
    %486 = vmatmul.mubr.f32.gmra.mrb[0].mxu0 %v419
    %v487 = vpop.f32.mrb[0].mxu0
    %v488 = vadd.f32 %v89, %v487
    %v489 = vpop.f32.mrb[0].mxu0
    %490 = vdwg.mxu0
    %v491 = vmax.f32 %v488, 0.0
    %492 = vset.pattern.permute.xlu0 4
    %493 = vperm.xlu0 %492, %v166
    %v494 = vpop.permute.xlu0 %493
    %v496 = vmul.f32 %v494, %v491
    %v497 = vadd.f32 %v416, %v496
    %498 = vrot.lane.b32.xlu0 %v417, 64
    %v499 = vpop.permute.xlu0 %498
    %v500 = vsel %vm91, %v499, 0
    %502 = vmatprep.subr.mxu0 0.0
    %503 = vmatpush1.msra.mxu0 %v75
    %504 = vmatprep.subr.mxu0 0.0
    %505 = vmatpush1.msra.mxu0 %v76
    %506 = vmatprep.subr.mxu0 0.0
    %507 = vmatpush1.msra.mxu0 %v77
    %508 = vmatprep.subr.mxu0 0.0
    %509 = vmatpush1.msra.mxu0 %v78
    %510 = vmatprep.subr.mxu0 0.0
    %511 = vmatpush1.msra.mxu0 %v79
    %512 = vmatprep.subr.mxu0 0.0
    %513 = vmatpush1.msra.mxu0 %v80
    %514 = vmatprep.subr.mxu0 0.0
    %515 = vmatpush1.msra.mxu0 %v81
    %516 = vmatprep.subr.mxu0 0.0
    %517 = vmatpush1.msra.mxu0 %v82
    %518 = vmatprep.subr.mxu0 0.0
    %519 = vmatpush1.msra.mxu0 0.0
    %520 = vmatprep.subr.mxu0 0.0
    %521 = vmatpush1.msra.mxu0 0.0
    %522 = vmatprep.subr.mxu0 0.0
    %523 = vmatpush1.msra.mxu0 0.0
    %524 = vmatprep.subr.mxu0 0.0
    %525 = vmatpush1.msra.mxu0 0.0
    %526 = vmatprep.subr.mxu0 0.0
    %527 = vmatpush1.msra.mxu0 0.0
    %528 = vmatprep.subr.mxu0 0.0
    %529 = vmatpush1.msra.mxu0 0.0
    %530 = vmatprep.subr.mxu0 0.0
    %531 = vmatpush1.msra.mxu0 0.0
    %532 = vmatprep.subr.mxu0 0.0
    %533 = vmatpush1.msra.mxu0 0.0
    %534 = vmatprep.subr.mxu0 0.0
    %535 = vmatpush1.msra.mxu0 0.0
    %536 = vmatprep.subr.mxu0 0.0
    %537 = vmatpush1.msra.mxu0 0.0
    %538 = vmatprep.subr.mxu0 0.0
    %539 = vmatpush1.msra.mxu0 0.0
    %540 = vmatprep.subr.mxu0 0.0
    %541 = vmatpush1.msra.mxu0 0.0
    %542 = vmatprep.subr.mxu0 0.0
    %543 = vmatpush1.msra.mxu0 0.0
    %544 = vmatprep.subr.mxu0 0.0
    %545 = vmatpush1.msra.mxu0 0.0
    %546 = vmatprep.subr.mxu0 0.0
    %547 = vmatpush1.msra.mxu0 0.0
    %548 = vmatprep.subr.mxu0 0.0
    %549 = vmatpush1.msra.mxu0 0.0
    %550 = vmatprep.subr.mxu0 0.0
    %551 = vmatpush1.msra.mxu0 0.0
    %552 = vmatprep.subr.mxu0 0.0
    %553 = vmatpush1.msra.mxu0 0.0
    %554 = vmatprep.subr.mxu0 0.0
    %555 = vmatpush1.msra.mxu0 0.0
    %556 = vmatprep.subr.mxu0 0.0
    %557 = vmatpush1.msra.mxu0 0.0
    %558 = vmatprep.subr.mxu0 0.0
    %559 = vmatpush1.msra.mxu0 0.0
    %560 = vmatprep.subr.mxu0 0.0
    %561 = vmatpush1.msra.mxu0 0.0
    %562 = vmatprep.subr.mxu0 0.0
    %563 = vmatpush1.msra.mxu0 0.0
    %564 = vmatprep.subr.mxu0 0.0
    %565 = vmatpush1.msra.mxu0 0.0
    %566 = vmatprep.mubr.f32.mxu0 0.0
    %567 = vmatmul.mubr.f32.gmra.mrb[0].mxu0 %v500
    %v568 = vpop.f32.mrb[0].mxu0
    %v569 = vadd.f32 %v89, %v568
    %v570 = vpop.f32.mrb[0].mxu0
    %571 = vdwg.mxu0
    %v572 = vmax.f32 %v569, 0.0
    %573 = vset.pattern.permute.xlu0 5
    %574 = vperm.xlu0 %573, %v166
    %v575 = vpop.permute.xlu0 %574
    %v577 = vmul.f32 %v575, %v572
    %v578 = vadd.f32 %v497, %v577
    %v579 = vld [vmem:[#allocation2 + $0x18] sm:$0xff]
    %v581 = vsel %vm91, %v579, 0
    %583 = vmatprep.subr.mxu0 0.0
    %584 = vmatpush1.msra.mxu0 %v75
    %585 = vmatprep.subr.mxu0 0.0
    %586 = vmatpush1.msra.mxu0 %v76
    %587 = vmatprep.subr.mxu0 0.0
    %588 = vmatpush1.msra.mxu0 %v77
    %589 = vmatprep.subr.mxu0 0.0
    %590 = vmatpush1.msra.mxu0 %v78
    %591 = vmatprep.subr.mxu0 0.0
    %592 = vmatpush1.msra.mxu0 %v79
    %593 = vmatprep.subr.mxu0 0.0
    %594 = vmatpush1.msra.mxu0 %v80
    %595 = vmatprep.subr.mxu0 0.0
    %596 = vmatpush1.msra.mxu0 %v81
    %597 = vmatprep.subr.mxu0 0.0
    %598 = vmatpush1.msra.mxu0 %v82
    %599 = vmatprep.subr.mxu0 0.0
    %600 = vmatpush1.msra.mxu0 0.0
    %601 = vmatprep.subr.mxu0 0.0
    %602 = vmatpush1.msra.mxu0 0.0
    %603 = vmatprep.subr.mxu0 0.0
    %604 = vmatpush1.msra.mxu0 0.0
    %605 = vmatprep.subr.mxu0 0.0
    %606 = vmatpush1.msra.mxu0 0.0
    %607 = vmatprep.subr.mxu0 0.0
    %608 = vmatpush1.msra.mxu0 0.0
    %609 = vmatprep.subr.mxu0 0.0
    %610 = vmatpush1.msra.mxu0 0.0
    %611 = vmatprep.subr.mxu0 0.0
    %612 = vmatpush1.msra.mxu0 0.0
    %613 = vmatprep.subr.mxu0 0.0
    %614 = vmatpush1.msra.mxu0 0.0
    %615 = vmatprep.subr.mxu0 0.0
    %616 = vmatpush1.msra.mxu0 0.0
    %617 = vmatprep.subr.mxu0 0.0
    %618 = vmatpush1.msra.mxu0 0.0
    %619 = vmatprep.subr.mxu0 0.0
    %620 = vmatpush1.msra.mxu0 0.0
    %621 = vmatprep.subr.mxu0 0.0
    %622 = vmatpush1.msra.mxu0 0.0
    %623 = vmatprep.subr.mxu0 0.0
    %624 = vmatpush1.msra.mxu0 0.0
    %625 = vmatprep.subr.mxu0 0.0
    %626 = vmatpush1.msra.mxu0 0.0
    %627 = vmatprep.subr.mxu0 0.0
    %628 = vmatpush1.msra.mxu0 0.0
    %629 = vmatprep.subr.mxu0 0.0
    %630 = vmatpush1.msra.mxu0 0.0
    %631 = vmatprep.subr.mxu0 0.0
    %632 = vmatpush1.msra.mxu0 0.0
    %633 = vmatprep.subr.mxu0 0.0
    %634 = vmatpush1.msra.mxu0 0.0
    %635 = vmatprep.subr.mxu0 0.0
    %636 = vmatpush1.msra.mxu0 0.0
    %637 = vmatprep.subr.mxu0 0.0
    %638 = vmatpush1.msra.mxu0 0.0
    %639 = vmatprep.subr.mxu0 0.0
    %640 = vmatpush1.msra.mxu0 0.0
    %641 = vmatprep.subr.mxu0 0.0
    %642 = vmatpush1.msra.mxu0 0.0
    %643 = vmatprep.subr.mxu0 0.0
    %644 = vmatpush1.msra.mxu0 0.0
    %645 = vmatprep.subr.mxu0 0.0
    %646 = vmatpush1.msra.mxu0 0.0
    %647 = vmatprep.mubr.f32.mxu0 0.0
    %648 = vmatmul.mubr.f32.gmra.mrb[0].mxu0 %v581
    %v649 = vpop.f32.mrb[0].mxu0
    %v650 = vadd.f32 %v89, %v649
    %v651 = vpop.f32.mrb[0].mxu0
    %652 = vdwg.mxu0
    %v653 = vmax.f32 %v650, 0.0
    %654 = vset.pattern.permute.xlu0 6
    %655 = vperm.xlu0 %654, %v166
    %v656 = vpop.permute.xlu0 %655
    %v658 = vmul.f32 %v656, %v653
    %v659 = vadd.f32 %v578, %v658
    %660 = vrot.lane.b32.xlu0 %v579, 64
    %v661 = vpop.permute.xlu0 %660
    %v662 = vsel %vm91, %v661, 0
    %664 = vmatprep.subr.mxu0 0.0
    %665 = vmatpush1.msra.mxu0 %v75
    %666 = vmatprep.subr.mxu0 0.0
    %667 = vmatpush1.msra.mxu0 %v76
    %668 = vmatprep.subr.mxu0 0.0
    %669 = vmatpush1.msra.mxu0 %v77
    %670 = vmatprep.subr.mxu0 0.0
    %671 = vmatpush1.msra.mxu0 %v78
    %672 = vmatprep.subr.mxu0 0.0
    %673 = vmatpush1.msra.mxu0 %v79
    %674 = vmatprep.subr.mxu0 0.0
    %675 = vmatpush1.msra.mxu0 %v80
    %676 = vmatprep.subr.mxu0 0.0
    %677 = vmatpush1.msra.mxu0 %v81
    %678 = vmatprep.subr.mxu0 0.0
    %679 = vmatpush1.msra.mxu0 %v82
    %680 = vmatprep.subr.mxu0 0.0
    %681 = vmatpush1.msra.mxu0 0.0
    %682 = vmatprep.subr.mxu0 0.0
    %683 = vmatpush1.msra.mxu0 0.0
    %684 = vmatprep.subr.mxu0 0.0
    %685 = vmatpush1.msra.mxu0 0.0
    %686 = vmatprep.subr.mxu0 0.0
    %687 = vmatpush1.msra.mxu0 0.0
    %688 = vmatprep.subr.mxu0 0.0
    %689 = vmatpush1.msra.mxu0 0.0
    %690 = vmatprep.subr.mxu0 0.0
    %691 = vmatpush1.msra.mxu0 0.0
    %692 = vmatprep.subr.mxu0 0.0
    %693 = vmatpush1.msra.mxu0 0.0
    %694 = vmatprep.subr.mxu0 0.0
    %695 = vmatpush1.msra.mxu0 0.0
    %696 = vmatprep.subr.mxu0 0.0
    %697 = vmatpush1.msra.mxu0 0.0
    %698 = vmatprep.subr.mxu0 0.0
    %699 = vmatpush1.msra.mxu0 0.0
    %700 = vmatprep.subr.mxu0 0.0
    %701 = vmatpush1.msra.mxu0 0.0
    %702 = vmatprep.subr.mxu0 0.0
    %703 = vmatpush1.msra.mxu0 0.0
    %704 = vmatprep.subr.mxu0 0.0
    %705 = vmatpush1.msra.mxu0 0.0
    %706 = vmatprep.subr.mxu0 0.0
    %707 = vmatpush1.msra.mxu0 0.0
    %708 = vmatprep.subr.mxu0 0.0
    %709 = vmatpush1.msra.mxu0 0.0
    %710 = vmatprep.subr.mxu0 0.0
    %711 = vmatpush1.msra.mxu0 0.0
    %712 = vmatprep.subr.mxu0 0.0
    %713 = vmatpush1.msra.mxu0 0.0
    %714 = vmatprep.subr.mxu0 0.0
    %715 = vmatpush1.msra.mxu0 0.0
    %716 = vmatprep.subr.mxu0 0.0
    %717 = vmatpush1.msra.mxu0 0.0
    %718 = vmatprep.subr.mxu0 0.0
    %719 = vmatpush1.msra.mxu0 0.0
    %720 = vmatprep.subr.mxu0 0.0
    %721 = vmatpush1.msra.mxu0 0.0
    %722 = vmatprep.subr.mxu0 0.0
    %723 = vmatpush1.msra.mxu0 0.0
    %724 = vmatprep.subr.mxu0 0.0
    %725 = vmatpush1.msra.mxu0 0.0
    %726 = vmatprep.subr.mxu0 0.0
    %727 = vmatpush1.msra.mxu0 0.0
    %728 = vmatprep.mubr.f32.mxu0 0.0
    %729 = vmatmul.mubr.f32.gmra.mrb[0].mxu0 %v662
    %v730 = vpop.f32.mrb[0].mxu0
    %v731 = vadd.f32 %v89, %v730
    %v732 = vpop.f32.mrb[0].mxu0
    %733 = vdwg.mxu0
    %v734 = vmax.f32 %v731, 0.0
    %735 = vset.pattern.permute.xlu0 7
    %736 = vperm.xlu0 %735, %v166
    %v737 = vpop.permute.xlu0 %736
    %v739 = vmul.f32 %v737, %v734
    %v740 = vadd.f32 %v659, %v739
    %v741 = vld [vmem:[#allocation8] sm:$0xff]
    %v742 = vld [vmem:[#allocation8 + $0x8] sm:$0xff]
    %v743 = vld [vmem:[#allocation8 + $0x10] sm:$0xff]
    %v744 = vld [vmem:[#allocation8 + $0x18] sm:$0xff]
    %v745 = vld [vmem:[#allocation8 + $0x20] sm:$0xff]
    %v746 = vld [vmem:[#allocation8 + $0x28] sm:$0xff]
    %v747 = vld [vmem:[#allocation8 + $0x30] sm:$0xff]
    %v748 = vld [vmem:[#allocation8 + $0x38] sm:$0xff]
    %v749 = vld [vmem:[#allocation8 + $0x40] sm:$0xff]
    %v750 = vld [vmem:[#allocation8 + $0x48] sm:$0xff]
    %v751 = vld [vmem:[#allocation8 + $0x50] sm:$0xff]
    %v752 = vld [vmem:[#allocation8 + $0x58] sm:$0xff]
    %v753 = vld [vmem:[#allocation8 + $0x60] sm:$0xff]
    %v754 = vld [vmem:[#allocation8 + $0x68] sm:$0xff]
    %v755 = vld [vmem:[#allocation8 + $0x70] sm:$0xff]
    %v756 = vld [vmem:[#allocation8 + $0x78] sm:$0xff]
    %v757 = vld [vmem:[%s5] sm:$0x1]
    %v759 = vlaneseq
    %v760 = vshrl.u32 %v759, 7
    %v761 = vsub.s32 0, %v760
    %v762 = vrot.slane %v757, %v761
    %764 = vmatprep.subr.mxu0 0.0
    %765 = vmatpush1.msra.mxu0 %v741
    %766 = vmatprep.subr.mxu0 0.0
    %767 = vmatpush1.msra.mxu0 %v742
    %768 = vmatprep.subr.mxu0 0.0
    %769 = vmatpush1.msra.mxu0 %v743
    %770 = vmatprep.subr.mxu0 0.0
    %771 = vmatpush1.msra.mxu0 %v744
    %772 = vmatprep.subr.mxu0 0.0
    %773 = vmatpush1.msra.mxu0 %v745
    %774 = vmatprep.subr.mxu0 0.0
    %775 = vmatpush1.msra.mxu0 %v746
    %776 = vmatprep.subr.mxu0 0.0
    %777 = vmatpush1.msra.mxu0 %v747
    %778 = vmatprep.subr.mxu0 0.0
    %779 = vmatpush1.msra.mxu0 %v748
    %780 = vmatprep.subr.mxu0 0.0
    %781 = vmatpush1.msra.mxu0 %v749
    %782 = vmatprep.subr.mxu0 0.0
    %783 = vmatpush1.msra.mxu0 %v750
    %784 = vmatprep.subr.mxu0 0.0
    %785 = vmatpush1.msra.mxu0 %v751
    %786 = vmatprep.subr.mxu0 0.0
    %787 = vmatpush1.msra.mxu0 %v752
    %788 = vmatprep.subr.mxu0 0.0
    %789 = vmatpush1.msra.mxu0 %v753
    %790 = vmatprep.subr.mxu0 0.0
    %791 = vmatpush1.msra.mxu0 %v754
    %792 = vmatprep.subr.mxu0 0.0
    %793 = vmatpush1.msra.mxu0 %v755
    %794 = vmatprep.subr.mxu0 0.0
    %795 = vmatpush1.msra.mxu0 %v756
    %796 = vmatprep.subr.mxu0 0.0
    %797 = vmatpush1.msra.mxu0 0.0
    %798 = vmatprep.subr.mxu0 0.0
    %799 = vmatpush1.msra.mxu0 0.0
    %800 = vmatprep.subr.mxu0 0.0
    %801 = vmatpush1.msra.mxu0 0.0
    %802 = vmatprep.subr.mxu0 0.0
    %803 = vmatpush1.msra.mxu0 0.0
    %804 = vmatprep.subr.mxu0 0.0
    %805 = vmatpush1.msra.mxu0 0.0
    %806 = vmatprep.subr.mxu0 0.0
    %807 = vmatpush1.msra.mxu0 0.0
    %808 = vmatprep.subr.mxu0 0.0
    %809 = vmatpush1.msra.mxu0 0.0
    %810 = vmatprep.subr.mxu0 0.0
    %811 = vmatpush1.msra.mxu0 0.0
    %812 = vmatprep.subr.mxu0 0.0
    %813 = vmatpush1.msra.mxu0 0.0
    %814 = vmatprep.subr.mxu0 0.0
    %815 = vmatpush1.msra.mxu0 0.0
    %816 = vmatprep.subr.mxu0 0.0
    %817 = vmatpush1.msra.mxu0 0.0
    %818 = vmatprep.subr.mxu0 0.0
    %819 = vmatpush1.msra.mxu0 0.0
    %820 = vmatprep.subr.mxu0 0.0
    %821 = vmatpush1.msra.mxu0 0.0
    %822 = vmatprep.subr.mxu0 0.0
    %823 = vmatpush1.msra.mxu0 0.0
    %824 = vmatprep.subr.mxu0 0.0
    %825 = vmatpush1.msra.mxu0 0.0
    %826 = vmatprep.subr.mxu0 0.0
    %827 = vmatpush1.msra.mxu0 0.0
    %828 = vmatprep.mubr.f32.mxu0 0.0
    %829 = vmatmul.mubr.f32.gmra.mrb[0].mxu0 %v740
    %v830 = vpop.f32.mrb[0].mxu0
    %v831 = vadd.f32 %v762, %v830
    %v832 = vpop.f32.mrb[0].mxu0
    %833 = vdwg.mxu0
    %834 = vst [vmem:[#allocation10] sm:$0xff] %v831
    // Predicated region
    $region42: #{tpu_custom_call.1} parent=1 // pred_check
      _
    $region43: #{tpu_custom_call.1} parent=1 // pred_check_branch
      %836 = sbr.rel (0) target = $region45
    $region44: #{tpu_custom_call.1} parent=1 // pred_region
      %s838 = ssub.s32 128, 128
      %839 = vsyncadd [#allocation4], %s838
      %s841 = sshll.u32 [#allocation10], 4
      %s842 = int_to_ptr.vmem [resolvable:$true] %s841
      %844 = dma.vmem_to_hbm [thread:$0]  %s842, 128, %s6, [#allocation4]
    $region45: #{tpu_custom_call.1} parent=1 // pred_fallthru
      _
    // Predicated region
    $region46: #{tpu_custom_call.1} parent=1 // pred_check
      _
    $region47: #{tpu_custom_call.1} parent=1 // pred_check_branch
      %846 = sbr.rel (0) target = $region49
    $region48: #{tpu_custom_call.1} parent=1 // pred_region
      %847 = dma.done [#allocation4], 128
    $region49: #{tpu_custom_call.1} parent=1 // pred_fallthru
      _
    %848 = vsyncpa [#allocation3], 1
    %849 = vsyncpa [#allocation6], 1
    %850 = vsyncpa [#allocation9], 1
    %851 = vsyncpa [#allocation4], 1

</llo_original>
